<compile_context>
chip_gen: v6e
topology: v6e:2x2x1
jax: 0.10.0
libtpu: 0.0.40
codegen_flags: <defaults>
</compile_context>

<pallas_src>
import functools

import jax
import jax.numpy as jnp
from jax.experimental import pallas as pl
from jax.experimental.pallas import tpu as pltpu


def _gsp_kernel(x_ref, mean_ref, std_ref, sum_acc, sq_acc, *, total_t, lanes):
    """One (bt, ct) output tile; the T axis is streamed over grid axis 2."""
    k = pl.program_id(2)

    @pl.when(k == 0)
    def _init():
        sum_acc[...] = jnp.zeros_like(sum_acc)
        sq_acc[...] = jnp.zeros_like(sq_acc)

    # Hot loop: pure VPU.  Fold the tt-wide chunk into lane-width partials via
    # static, lane-aligned slices (independent per-vreg add chains -> the
    # partials live in vregs across the unrolled segments); the VMEM
    # accumulators see a single read-modify-write per grid step.
    tt = x_ref.shape[-1]
    n_seg = tt // lanes
    ps = sum_acc[...]
    pq = sq_acc[...]
    for j in range(n_seg):                       # static unroll, <= 16 segments
        xj = x_ref[:, :, j * lanes:(j + 1) * lanes].astype(jnp.float32)
        ps = ps + xj                             # cast, add, mul, add per vreg
        pq = pq + xj * xj
    sum_acc[...] = ps
    sq_acc[...] = pq

    @pl.when(k == pl.num_programs(2) - 1)
    def _finalize():
        # One small cross-lane (XLU) reduce per output tile.
        s = jnp.sum(sum_acc[...], axis=-1)       # (bt, ct)
        ss = jnp.sum(sq_acc[...], axis=-1)       # (bt, ct)
        inv_t = jnp.float32(1.0 / total_t)
        mean = s * inv_t
        # Unbiased variance (torch.std default).  T == 1 -> /0 -> nan (torch-like).
        var = (ss - s * s * inv_t) / jnp.float32(total_t - 1)
        var = jnp.maximum(var, 0.0)              # guard single-pass round-off
        std = jnp.sqrt(var)
        mean_ref[...] = mean.astype(mean_ref.dtype)
        std_ref[...] = std.astype(std_ref.dtype)


def _pick_tiles(B, C, T, itemsize):
    """Choose (bt, ct, tt) block sizes.

    Constraints / preferences:
      * input block (bt, ct, tt): tt % 128 == 0 or tt == T; ct % 128 == 0 or ct == C
      * output blocks (bt, ct):   bt % 8 == 0 or bt == B;  ct as above (lane-dense)
      * ~8 MiB per streamed input block (in the input dtype) -> 2x buffered
        input + two (bt, ct, 128) f32 accumulators fit every chip's scoped
        VMEM (v5e 16 MiB raised to 32, v6e/v7x 32; v7x physical VMEM 64 MiB)
      * prefer >= 2 (B, C) "parallel" tiles so v7x streams on both TensorCores
    """
    bt = 8 if B % 8 == 0 else B

    ct_cands = [c for c in (512, 384, 256, 128) if c <= C and C % c == 0] or [C]
    tt_cands = [t for t in (2048, 1024, 512, 256, 128) if t <= T and T % t == 0] or [T]

    budget = 8 * 1024 * 1024  # bytes per streamed input block, in input dtype

    def score(pair):
        c, t = pair
        blk = bt * c * t * itemsize
        fits = blk <= budget
        two_parallel_tiles = (B // bt) * (C // c) >= 2
        # prefer: fits the budget, then >= 2 parallel tiles, then biggest block
        return (fits, two_parallel_tiles, blk if fits else -blk)

    ct, tt = max(((c, t) for c in ct_cands for t in tt_cands), key=score)
    # TODO(synk): if C and T are both huge and not multiples of 128, the
    # full-extent fallback block can exceed the VMEM budget; handling that
    # needs masked partial blocks.
    return bt, ct, tt


def global_statistical_pooling(x: jax.Array) -> jax.Array:
    """x: (B, C, T) -> (B, 2*C). Matches torch mean/std(dim=-1) + cat(dim=1)."""
    B, C, T = x.shape
    bt, ct, tt = _pick_tiles(B, C, T, x.dtype.itemsize)
    lanes = 128 if tt % 128 == 0 else tt
    grid = (B // bt, C // ct, T // tt)

    kernel = functools.partial(_gsp_kernel, total_t=T, lanes=lanes)

    mean, std = pl.pallas_call(
        kernel,
        # Two lane-dense (B, C) outputs (no size-2 sublane dim -> unmasked vst);
        # the channel concat is layout plumbing in the wrapper.
        out_shape=(jax.ShapeDtypeStruct((B, C), x.dtype),
                   jax.ShapeDtypeStruct((B, C), x.dtype)),
        grid_spec=pltpu.PrefetchScalarGridSpec(
            num_scalar_prefetch=0,
            grid=grid,
            in_specs=[pl.BlockSpec((bt, ct, tt), lambda b, c, k: (b, c, k))],
            out_specs=[pl.BlockSpec((bt, ct), lambda b, c, k: (b, c)),
                       pl.BlockSpec((bt, ct), lambda b, c, k: (b, c))],
            scratch_shapes=[
                pltpu.VMEM((bt, ct, lanes), jnp.float32),   # running sum(x)
                pltpu.VMEM((bt, ct, lanes), jnp.float32),   # running sum(x*x)
            ],
        ),
        compiler_params=pltpu.CompilerParams(
            # B/C tiles independent (v7x megacore sharding); T is the reduction.
            dimension_semantics=("parallel", "parallel", "arbitrary"),
            # <= default scoped limit on v6e/v7x, raises v5e's 16 MiB; the tile
            # budget keeps 2x input + accumulators + outputs ~<= 20 MiB.
            vmem_limit_bytes=32 * 1024 * 1024,
        ),
    )(x)

    return jnp.concatenate([mean, std], axis=1)


if __name__ == "__main__":
    key = jax.random.PRNGKey(0)
    k0, k1, k2 = jax.random.split(key, 3)

    # Small shape implied by the module's forward: x is (B, C, T).
    B, C, T = 2, 4, 16
    x = jax.random.normal(k0, (B, C, T), dtype=jnp.float32)
    z = jax.block_until_ready(global_statistical_pooling(x))
    ref = jnp.concatenate([jnp.mean(x, -1), jnp.std(x, -1, ddof=1)], axis=1)
    assert z.shape == (B, 2 * C), z.shape
    assert jnp.allclose(z, ref, atol=1e-5, rtol=1e-5)

    # Larger f32 shape exercising the tiled / multi-parallel-tile path
    # (grid = (1, 3, 1) with ct=128, tt=1024).
    B2, C2, T2 = 2, 384, 1024
    x2 = jax.random.normal(k1, (B2, C2, T2), dtype=jnp.float32)
    z2 = jax.block_until_ready(global_statistical_pooling(x2))
    ref2 = jnp.concatenate([jnp.mean(x2, -1), jnp.std(x2, -1, ddof=1)], axis=1)
    assert z2.shape == (B2, 2 * C2), z2.shape
    assert jnp.allclose(z2, ref2, atol=1e-4, rtol=1e-4)

    # bf16 input path: streamed tiles stay bf16, accumulation in f32.
    x3 = jax.random.normal(k2, (2, 128, 256), dtype=jnp.bfloat16)
    z3 = jax.block_until_ready(global_statistical_pooling(x3)).astype(jnp.float32)
    x3f = x3.astype(jnp.float32)
    ref3 = jnp.concatenate([jnp.mean(x3f, -1), jnp.std(x3f, -1, ddof=1)], axis=1)
    assert jnp.allclose(z3, ref3, atol=3e-2, rtol=3e-2)

    print("KERNEL_OK")
</pallas_src>

<mosaic_0001>
module attributes {stable_mosaic.version = 11 : i64} {
  func.func @_gsp_kernel(%arg0: i32, %arg1: i32, %arg2: i32, %arg3: memref<2x4x16xf32, #tpu.memory_space<vmem>>, %arg4: memref<2x4xf32, #tpu.memory_space<vmem>>, %arg5: memref<2x4xf32, #tpu.memory_space<vmem>>, %arg6: memref<2x4x16xf32, #tpu.memory_space<vmem>>, %arg7: memref<2x4x16xf32, #tpu.memory_space<vmem>>) attributes {dimension_semantics = [#tpu.dimension_semantics<parallel>, #tpu.dimension_semantics<parallel>, #tpu.dimension_semantics<arbitrary>], iteration_bounds = array<i64: 1, 1, 1>, scalar_prefetch = 0 : i64, scratch_operands = 2 : i64, tpu.core_type = #tpu.core_type<tc>, window_params = [{transform_indices = @transform_0, window_bounds = array<i64: 2, 4, 16>}, {transform_indices = @transform_1, window_bounds = array<i64: 2, 4>}, {transform_indices = @transform_2, window_bounds = array<i64: 2, 4>}]} {
    %c0_i32 = arith.constant 0 : i32
    %0 = arith.cmpi eq, %arg2, %c0_i32 : i32
    %1 = arith.extui %0 : i1 to i32
    %c0_i32_0 = arith.constant 0 : i32
    %2 = arith.cmpi ne, %1, %c0_i32_0 : i32
    scf.if %2 {
      %cst = arith.constant 0.000000e+00 : f32
      %14 = vector.broadcast %cst : f32 to vector<2x4x16xf32>
      %c0_17 = arith.constant 0 : index
      %c0_18 = arith.constant 0 : index
      %c0_19 = arith.constant 0 : index
      %15 = vector.load %arg6[%c0_17, %c0_18, %c0_19] : memref<2x4x16xf32, #tpu.memory_space<vmem>>, vector<2x4x16xf32>
      tpu.vector_store %arg6[%c0_17, %c0_18, %c0_19], %14 {strides = array<i32>} : memref<2x4x16xf32, #tpu.memory_space<vmem>>, vector<2x4x16xf32>,
      %cst_20 = arith.constant 0.000000e+00 : f32
      %16 = vector.broadcast %cst_20 : f32 to vector<2x4x16xf32>
      %c0_21 = arith.constant 0 : index
      %c0_22 = arith.constant 0 : index
      %c0_23 = arith.constant 0 : index
      %17 = vector.load %arg7[%c0_21, %c0_22, %c0_23] : memref<2x4x16xf32, #tpu.memory_space<vmem>>, vector<2x4x16xf32>
      tpu.vector_store %arg7[%c0_21, %c0_22, %c0_23], %16 {strides = array<i32>} : memref<2x4x16xf32, #tpu.memory_space<vmem>>, vector<2x4x16xf32>,
    } else {
    }
    %c0 = arith.constant 0 : index
    %c0_1 = arith.constant 0 : index
    %c0_2 = arith.constant 0 : index
    %3 = vector.load %arg6[%c0, %c0_1, %c0_2] : memref<2x4x16xf32, #tpu.memory_space<vmem>>, vector<2x4x16xf32>
    %c0_3 = arith.constant 0 : index
    %c0_4 = arith.constant 0 : index
    %c0_5 = arith.constant 0 : index
    %4 = vector.load %arg7[%c0_3, %c0_4, %c0_5] : memref<2x4x16xf32, #tpu.memory_space<vmem>>, vector<2x4x16xf32>
    %c0_6 = arith.constant 0 : index
    %c0_7 = arith.constant 0 : index
    %c0_8 = arith.constant 0 : index
    %5 = vector.load %arg3[%c0_6, %c0_7, %c0_8] : memref<2x4x16xf32, #tpu.memory_space<vmem>>, vector<2x4x16xf32>
    %6 = arith.addf %3, %5 : vector<2x4x16xf32>
    %7 = arith.mulf %5, %5 : vector<2x4x16xf32>
    %8 = arith.addf %4, %7 : vector<2x4x16xf32>
    %c0_9 = arith.constant 0 : index
    %c0_10 = arith.constant 0 : index
    %c0_11 = arith.constant 0 : index
    %9 = vector.load %arg6[%c0_9, %c0_10, %c0_11] : memref<2x4x16xf32, #tpu.memory_space<vmem>>, vector<2x4x16xf32>
    tpu.vector_store %arg6[%c0_9, %c0_10, %c0_11], %6 {strides = array<i32>} : memref<2x4x16xf32, #tpu.memory_space<vmem>>, vector<2x4x16xf32>,
    %c0_12 = arith.constant 0 : index
    %c0_13 = arith.constant 0 : index
    %c0_14 = arith.constant 0 : index
    %10 = vector.load %arg7[%c0_12, %c0_13, %c0_14] : memref<2x4x16xf32, #tpu.memory_space<vmem>>, vector<2x4x16xf32>
    tpu.vector_store %arg7[%c0_12, %c0_13, %c0_14], %8 {strides = array<i32>} : memref<2x4x16xf32, #tpu.memory_space<vmem>>, vector<2x4x16xf32>,
    %c0_i32_15 = arith.constant 0 : i32
    %11 = arith.cmpi eq, %arg2, %c0_i32_15 : i32
    %12 = arith.extui %11 : i1 to i32
    %c0_i32_16 = arith.constant 0 : i32
    %13 = arith.cmpi ne, %12, %c0_i32_16 : i32
    scf.if %13 {
      %c0_17 = arith.constant 0 : index
      %c0_18 = arith.constant 0 : index
      %c0_19 = arith.constant 0 : index
      %14 = vector.load %arg6[%c0_17, %c0_18, %c0_19] : memref<2x4x16xf32, #tpu.memory_space<vmem>>, vector<2x4x16xf32>
      %cst = arith.constant dense<0.000000e+00> : vector<2x4xf32>
      %15 = vector.multi_reduction <add>, %14, %cst [2] : vector<2x4x16xf32> to vector<2x4xf32>
      %c0_20 = arith.constant 0 : index
      %c0_21 = arith.constant 0 : index
      %c0_22 = arith.constant 0 : index
      %16 = vector.load %arg7[%c0_20, %c0_21, %c0_22] : memref<2x4x16xf32, #tpu.memory_space<vmem>>, vector<2x4x16xf32>
      %cst_23 = arith.constant dense<0.000000e+00> : vector<2x4xf32>
      %17 = vector.multi_reduction <add>, %16, %cst_23 [2] : vector<2x4x16xf32> to vector<2x4xf32>
      %cst_24 = arith.constant 6.250000e-02 : f32
      %18 = vector.broadcast %cst_24 : f32 to vector<2x4xf32>
      %19 = arith.mulf %15, %18 : vector<2x4xf32>
      %20 = arith.mulf %15, %15 : vector<2x4xf32>
      %cst_25 = arith.constant 6.250000e-02 : f32
      %21 = vector.broadcast %cst_25 : f32 to vector<2x4xf32>
      %22 = arith.mulf %20, %21 : vector<2x4xf32>
      %23 = arith.subf %17, %22 : vector<2x4xf32>
      %cst_26 = arith.constant 1.500000e+01 : f32
      %24 = vector.broadcast %cst_26 : f32 to vector<2x4xf32>
      %25 = arith.divf %23, %24 : vector<2x4xf32>
      %cst_27 = arith.constant 0.000000e+00 : f32
      %26 = vector.broadcast %cst_27 : f32 to vector<2x4xf32>
      %27 = arith.maximumf %25, %26 : vector<2x4xf32>
      %28 = math.sqrt %27 : vector<2x4xf32>
      %c0_28 = arith.constant 0 : index
      %c0_29 = arith.constant 0 : index
      %29 = vector.load %arg4[%c0_28, %c0_29] : memref<2x4xf32, #tpu.memory_space<vmem>>, vector<2x4xf32>
      tpu.vector_store %arg4[%c0_28, %c0_29], %19 {strides = array<i32>} : memref<2x4xf32, #tpu.memory_space<vmem>>, vector<2x4xf32>,
      %c0_30 = arith.constant 0 : index
      %c0_31 = arith.constant 0 : index
      %30 = vector.load %arg5[%c0_30, %c0_31] : memref<2x4xf32, #tpu.memory_space<vmem>>, vector<2x4xf32>
      tpu.vector_store %arg5[%c0_30, %c0_31], %28 {strides = array<i32>} : memref<2x4xf32, #tpu.memory_space<vmem>>, vector<2x4xf32>,
    } else {
    }
    return
  }
  func.func @transform_0(%arg0: i32, %arg1: i32, %arg2: i32) -> (i32, i32, i32) {
    %c0_i32 = arith.constant 0 : i32
    return %arg0, %arg1, %arg2 : i32, i32, i32
  }
  func.func @transform_1(%arg0: i32, %arg1: i32, %arg2: i32) -> (i32, i32) {
    %c0_i32 = arith.constant 0 : i32
    return %arg0, %arg1 : i32, i32
  }
  func.func @transform_2(%arg0: i32, %arg1: i32, %arg2: i32) -> (i32, i32) {
    %c0_i32 = arith.constant 0 : i32
    return %arg0, %arg1 : i32, i32
  }
}

</mosaic_0001>

<llo_original>
// kernel: tpu_custom_call.1
$region0: #{tpu_custom_call.1}
  #allocation0 [shape = 'u32[]', space=smem, size = 0x4, offset = 0x4, fixed_abs, tag = 'smem constant byte address 0x4 - core index']
  #allocation1 [shape = 'u32[144,128]{1,0:T(1,128)}', space=vmem, size = 0x12000, scoped, tag = 'internal scratch']
  #allocation2 [shape = 'f32[2,4,16]{2,1,0:T(4,128)}', space=vmem, size = 0x1000, scoped, tag = 'scratch operand']
  #allocation3 [shape = 'f32[2,4,16]{2,1,0:T(4,128)}', space=vmem, size = 0x1000, scoped, tag = 'scratch operand']
  %s0 = inlined_call_operand.hbm [shape: f32[2,4,16], index: 0, kind: input, shape index: {}]
  %s1 = inlined_call_operand.hbm [shape: f32[2,4], index: 1, kind: output, shape index: {0}]
  %s2 = inlined_call_operand.hbm [shape: f32[2,4], index: 2, kind: output, shape index: {1}]
  %3 = xla_tuple %s1, %s2
  %s4 = sld [smem:[#allocation0]]
  $region34: #{tpu_custom_call.1} parent=0
    _
  %s6 = ssub.s32 1, %s4
  %s7 = scalar_select 0, %s6, %s4
  $region1: #{tpu_custom_call.1} parent=0
    #allocation4 [shape = 'u8[4096]{0}', space=vmem, size = 0x1000, scoped, tag = 'input window, operand 0, single buffered']
    #allocation5 [shape = 's32[1]{0}', space=sflag, size = 0x4, scoped, tag = 'scoped memory for tpu_custom_call.1']
    #allocation6 [shape = 's32[1]{0}', space=sflag, size = 0x4, scoped, tag = 'scoped memory for tpu_custom_call.1']
    #allocation7 [shape = 'u8[1024]{0}', space=vmem, size = 0x400, scoped, tag = 'output window, operand 0, single buffered']
    #allocation8 [shape = 'u8[1024]{0}', space=vmem, size = 0x400, scoped, tag = 'output window, operand 1, single buffered']
    #allocation9 [shape = 's32[1]{0}', space=sflag, size = 0x4, scoped, tag = 'scoped memory for tpu_custom_call.1']
    %8 = vsyncpa [#allocation5], 0
    %9 = vsyncpa [#allocation6], 0
    %10 = vsyncpa [#allocation9], 0
    // Predicated region
    $region2: #{tpu_custom_call.1} parent=1 // pred_check
      _
    $region3: #{tpu_custom_call.1} parent=1 // pred_check_branch
      %12 = sbr.rel (0) target = $region5
    $region4: #{tpu_custom_call.1} parent=1 // pred_region
      %s14 = ssub.s32 128, 128
      %15 = vsyncadd [#allocation5], %s14
      %s16 = sshll.u32 [#allocation4], 4
      %s17 = int_to_ptr.vmem [resolvable:$true] %s16
      %22 = dma.hbm_to_vmem [thread:$0]  %s0, 128, %s17, [#allocation5], 64, 64, 4
    $region5: #{tpu_custom_call.1} parent=1 // pred_fallthru
      _
    // Predicated region
    $region6: #{tpu_custom_call.1} parent=1 // pred_check
      _
    $region7: #{tpu_custom_call.1} parent=1 // pred_check_branch
      %24 = sbr.rel (0) target = $region9
    $region8: #{tpu_custom_call.1} parent=1 // pred_region
      %25 = dma.done [#allocation5], 128
    $region9: #{tpu_custom_call.1} parent=1 // pred_fallthru
      _
    %p26 = scmp.eq.s32.totalorder 0, 0
    // Predicated region
    $region10: #{tpu_custom_call.1} parent=1 // pred_check
      %p27 = pneg %p26
    $region11: #{tpu_custom_call.1} parent=1 // pred_check_branch
      %29 = sbr.rel (%p27) target = $region13
    $region12: #{tpu_custom_call.1} parent=1 // pred_region
      %vm30 = vcmask 125952
      %31 = vst.msk [vmem:[#allocation2] sm:$0xf] %vm30, 0.0
      %32 = vst.msk [vmem:[#allocation2 + $0x4] sm:$0xf] %vm30, 0.0
      %33 = vst.msk [vmem:[#allocation3] sm:$0xf] %vm30, 0.0
      %34 = vst.msk [vmem:[#allocation3 + $0x4] sm:$0xf] %vm30, 0.0
    $region13: #{tpu_custom_call.1} parent=1 // pred_fallthru
      _
    %v35 = vld [vmem:[#allocation2] sm:$0xf]
    %v36 = vld [vmem:[#allocation2 + $0x4] sm:$0xf]
    %v37 = vld [vmem:[#allocation3] sm:$0xf]
    %v38 = vld [vmem:[#allocation3 + $0x4] sm:$0xf]
    %v39 = vld [vmem:[#allocation4] sm:$0xf]
    %v40 = vld [vmem:[#allocation4 + $0x4] sm:$0xf]
    %v41 = vadd.f32 %v35, %v39
    %v42 = vadd.f32 %v36, %v40
    %v43 = vmul.f32 %v39, %v39
    %v44 = vmul.f32 %v40, %v40
    %v45 = vadd.f32 %v37, %v43
    %v46 = vadd.f32 %v38, %v44
    %vm47 = vcmask 125952
    %48 = vst.msk [vmem:[#allocation2] sm:$0xf] %vm47, %v41
    %49 = vst.msk [vmem:[#allocation2 + $0x4] sm:$0xf] %vm47, %v42
    %50 = vst.msk [vmem:[#allocation3] sm:$0xf] %vm47, %v45
    %51 = vst.msk [vmem:[#allocation3 + $0x4] sm:$0xf] %vm47, %v46
    // Predicated region
    $region14: #{tpu_custom_call.1} parent=1 // pred_check
      %p52 = pneg %p26
    $region15: #{tpu_custom_call.1} parent=1 // pred_check_branch
      %54 = sbr.rel (%p52) target = $region17
    $region16: #{tpu_custom_call.1} parent=1 // pred_region
      %v55 = vld [vmem:[#allocation2] sm:$0xf]
      %v56 = vld [vmem:[#allocation2 + $0x4] sm:$0xf]
      %v57 = vsel %vm47, %v55, 0.0
      %58 = vadd.xlane.f32.xlu0 %v57
      %v59 = vpop.xlane.xlu0 %58
      %v60 = vsel %vm47, %v56, 0.0
      %61 = vadd.xlane.f32.xlu0 %v60
      %v62 = vpop.xlane.xlu0 %61
      %v63 = vld [vmem:[#allocation3] sm:$0xf]
      %v64 = vld [vmem:[#allocation3 + $0x4] sm:$0xf]
      %v65 = vsel %vm47, %v63, 0.0
      %66 = vadd.xlane.f32.xlu0 %v65
      %v67 = vpop.xlane.xlu0 %66
      %v68 = vsel %vm47, %v64, 0.0
      %69 = vadd.xlane.f32.xlu0 %v68
      %v70 = vpop.xlane.xlu0 %69
      %v71 = vmul.f32 %v59, 0.0625
      %v72 = vmul.f32 %v62, 0.0625
      %v73 = vmul.f32 %v59, %v59
      %v74 = vmul.f32 %v62, %v62
      %v75 = vmul.f32 %v73, 0.0625
      %v76 = vmul.f32 %v74, 0.0625
      %v77 = vsub.f32 %v67, %v75
      %v78 = vsub.f32 %v70, %v76
      %v79 = vrcp.pop 15.0
      %v80 = vmul.f32 %v77, %v79
      %v81 = vmul.f32 %v78, %v79
      %v82 = vmax.f32 %v80, 0.0
      %v83 = vmax.f32 %v81, 0.0
      %v84 = vrsqrt.pop %v82
      %v85 = vmul.f32 %v82, %v84
      %vm86 = vcmp.eq.f32.partialorder %v82, inf
      %v87 = vsel %vm86, %v82, %v85
      %vm88 = vcmp.eq.f32.partialorder %v82, 0.0
      %v89 = vand.u32 %v82, 2147483648
      %v90 = vsel %vm88, %v89, %v87
      %v91 = vrsqrt.pop %v83
      %v92 = vmul.f32 %v83, %v91
      %vm93 = vcmp.eq.f32.partialorder %v83, inf
      %v94 = vsel %vm93, %v83, %v92
      %vm95 = vcmp.eq.f32.partialorder %v83, 0.0
      %v96 = vand.u32 %v83, 2147483648
      %v97 = vsel %vm95, %v96, %v94
      %v100 = vlaneseq
      %v101 = vand.u32 %v100, 127
      %v102 = vlaneseq
      %v103 = vshrl.u32 %v102, 7
      %v104 = vsub.s32 %v101, %v103
      %v105 = vrot.slane %v71, %v104
      %v106 = vlaneseq
      %v107 = vshrl.u32 %v106, 7
      %v108 = vsub.s32 %v101, %v107
      %v109 = vrot.slane %v72, %v108
      %vm110 = vcmask 1041409
      %v111 = vsel %vm110, %v109, %v105
      %vm113 = vcmask 25600
      %114 = vst.msk [vmem:[#allocation7] sm:$0x3] %vm113, %v111
      %v117 = vlaneseq
      %v118 = vshrl.u32 %v117, 7
      %v119 = vsub.s32 %v101, %v118
      %v120 = vrot.slane %v90, %v119
      %v121 = vlaneseq
      %v122 = vshrl.u32 %v121, 7
      %v123 = vsub.s32 %v101, %v122
      %v124 = vrot.slane %v97, %v123
      %v125 = vsel %vm110, %v124, %v120
      %127 = vst.msk [vmem:[#allocation8] sm:$0x3] %vm113, %v125
    $region17: #{tpu_custom_call.1} parent=1 // pred_fallthru
      _
    // Predicated region
    $region18: #{tpu_custom_call.1} parent=1 // pred_check
      _
    $region19: #{tpu_custom_call.1} parent=1 // pred_check_branch
      %129 = sbr.rel (0) target = $region21
    $region20: #{tpu_custom_call.1} parent=1 // pred_region
      %s131 = ssub.s32 32, 32
      %132 = vsyncadd [#allocation6], %s131
      %s134 = sshll.u32 [#allocation7], 4
      %s135 = int_to_ptr.vmem [resolvable:$true] %s134
      %137 = dma.vmem_to_hbm [thread:$0]  %s135, 32, %s1, [#allocation6]
    $region21: #{tpu_custom_call.1} parent=1 // pred_fallthru
      _
    // Predicated region
    $region22: #{tpu_custom_call.1} parent=1 // pred_check
      _
    $region23: #{tpu_custom_call.1} parent=1 // pred_check_branch
      %139 = sbr.rel (0) target = $region25
    $region24: #{tpu_custom_call.1} parent=1 // pred_region
      %s141 = ssub.s32 32, 32
      %142 = vsyncadd [#allocation9], %s141
      %s144 = sshll.u32 [#allocation8], 4
      %s145 = int_to_ptr.vmem [resolvable:$true] %s144
      %147 = dma.vmem_to_hbm [thread:$0]  %s145, 32, %s2, [#allocation9]
    $region25: #{tpu_custom_call.1} parent=1 // pred_fallthru
      _
    // Predicated region
    $region26: #{tpu_custom_call.1} parent=1 // pred_check
      _
    $region27: #{tpu_custom_call.1} parent=1 // pred_check_branch
      %149 = sbr.rel (0) target = $region29
    $region28: #{tpu_custom_call.1} parent=1 // pred_region
      %150 = dma.done [#allocation6], 32
    $region29: #{tpu_custom_call.1} parent=1 // pred_fallthru
      _
    // Predicated region
    $region30: #{tpu_custom_call.1} parent=1 // pred_check
      _
    $region31: #{tpu_custom_call.1} parent=1 // pred_check_branch
      %152 = sbr.rel (0) target = $region33
    $region32: #{tpu_custom_call.1} parent=1 // pred_region
      %153 = dma.done [#allocation9], 32
    $region33: #{tpu_custom_call.1} parent=1 // pred_fallthru
      _
    %154 = vsyncpa [#allocation5], 1
    %155 = vsyncpa [#allocation6], 1
    %156 = vsyncpa [#allocation9], 1

</llo_original>
